<compile_context>
chip_gen: v5e
topology: v5e:2x2
jax: 0.10.0
libtpu: 0.0.40
codegen_flags: <defaults>
</compile_context>

<pallas_src>
import functools

import jax
import jax.numpy as jnp
import numpy as np
from jax import lax
from jax.experimental import pallas as pl
from jax.experimental.pallas import tpu as pltpu


def _pool_conv_kernel(x_ref, wt_ref, b_ref, o_ref, *, w):
    """x_ref:  (N, CIN*H*W)               f32 VMEM -- raw NCHW input, flattened lane-dense
       wt_ref: (CIN*H*W - W - 1, COUT*OH*OW) f32 VMEM -- unfolded (Toeplitz) conv weight
       b_ref:  (1, COUT*OH*OW)            f32 VMEM -- bias, repeated per output pixel
       o_ref:  (N, COUT*OH*OW)            f32 VMEM -- conv output, lane-dense
    """
    x = x_ref[...]                                   # one load, (N, L)
    L = x.shape[1]

    # ---- MaxPool2d(2) via shifted contiguous slices + elementwise maximum ----
    # Lane p encodes (ci, h, w_): p = ci*H*W + h*W + w_.
    # H-pairs: valid at even-h positions.    W-pairs: valid at even-w positions.
    xh = jnp.maximum(x[:, : L - w], x[:, w:])        # (N, L-w)   max over (h, h+1)
    xp = jnp.maximum(xh[:, : L - w - 1], xh[:, 1:])  # (N, L-w-1) max over 2x2 window
    # Lanes at (even h, even w) now hold the pooled values; all other lanes are
    # garbage and hit zero rows of wt_ref below.

    # ---- Conv2d(3,3,3) valid + bias: single MXU matmul for all batches/pixels ----
    o_ref[...] = (
        jnp.dot(xp, wt_ref[...], preferred_element_type=jnp.float32) + b_ref[...]
    )


@jax.jit
def model_forward(x, weight, bias):
    """x: (N, CIN, H, W) f32.  Returns (conv_out, x) like the PyTorch module."""
    N, CIN, H, W = x.shape
    COUT, _, KH, KW = weight.shape
    HP, WP = H // 2, W // 2
    OH, OW = HP - KH + 1, WP - KW + 1
    # The module requires even spatial dims and enough room for the 3x3 valid conv.
    assert H % 2 == 0 and W % 2 == 0 and OH >= 1 and OW >= 1

    # Free bitcast reshape only -- no data shuffle of the activation before the kernel.
    x2d = x.reshape(N, CIN * H * W).astype(jnp.float32)

    # Wrapper-built unfolded (Toeplitz) weight.  Row index into the pooled slab:
    #   p = ci*H*W + (2*(oh+kh))*W + 2*(ow+kw)   (pooled pixel sits at even h, even w)
    # Column index: co*OH*OW + oh*OW + ow.  All other rows are zero (absorb garbage lanes).
    kdim = CIN * H * W - W - 1
    co_i, ci_i, kh_i, kw_i, oh_i, ow_i = np.meshgrid(
        np.arange(COUT), np.arange(CIN), np.arange(KH), np.arange(KW),
        np.arange(OH), np.arange(OW), indexing="ij")
    rows = (ci_i * H * W + 2 * (oh_i + kh_i) * W + 2 * (ow_i + kw_i)).ravel()
    cols = (co_i * OH * OW + oh_i * OW + ow_i).ravel()
    vals = weight.astype(jnp.float32)[
        co_i.ravel(), ci_i.ravel(), kh_i.ravel(), kw_i.ravel()]
    wt = jnp.zeros((kdim, COUT * OH * OW), jnp.float32).at[rows, cols].set(vals)

    # Bias repeated per output pixel -> (1, COUT*OH*OW), broadcast-added in kernel.
    b_row = jnp.repeat(bias.astype(jnp.float32), OH * OW)[None, :]

    kern = functools.partial(_pool_conv_kernel, w=W)
    out2d = pl.pallas_call(
        kern,
        out_shape=jax.ShapeDtypeStruct((N, COUT * OH * OW), jnp.float32),
        in_specs=[
            pl.BlockSpec(memory_space=pltpu.MemorySpace.VMEM),   # x2d
            pl.BlockSpec(memory_space=pltpu.MemorySpace.VMEM),   # unfolded weight
            pl.BlockSpec(memory_space=pltpu.MemorySpace.VMEM),   # bias row
        ],
        out_specs=pl.BlockSpec(memory_space=pltpu.MemorySpace.VMEM),
    )(x2d, wt, b_row)

    conv_out = out2d.reshape(N, COUT, OH, OW)            # free bitcast reshape
    return conv_out, x


def _reference(x, weight, bias):
    """Pure-JAX reference: MaxPool2d(2) + Conv2d(3,3,3), NCHW."""
    pooled = lax.reduce_window(
        x, -jnp.inf, lax.max,
        window_dimensions=(1, 1, 2, 2),
        window_strides=(1, 1, 2, 2),
        padding="VALID",
    )
    conv = lax.conv_general_dilated(
        pooled, weight,
        window_strides=(1, 1), padding="VALID",
        dimension_numbers=("NCHW", "OIHW", "NCHW"),
    )
    return conv + bias[None, :, None, None]


if __name__ == "__main__":
    key = jax.random.PRNGKey(0)
    kx, kw_key, kb_key = jax.random.split(key, 3)

    N, CIN, H, W = 2, 3, 8, 8
    COUT, KH, KW = 3, 3, 3

    x = jax.random.normal(kx, (N, CIN, H, W), dtype=jnp.float32)

    # Deterministic Conv2d-style init (kaiming-uniform-ish bound = 1/sqrt(fan_in)).
    fan_in = CIN * KH * KW
    bound = 1.0 / np.sqrt(fan_in)
    weight = jax.random.uniform(kw_key, (COUT, CIN, KH, KW), jnp.float32, -bound, bound)
    bias = jax.random.uniform(kb_key, (COUT,), jnp.float32, -bound, bound)

    conv_out, x_out = model_forward(x, weight, bias)
    jax.block_until_ready((conv_out, x_out))

    ref = _reference(x, weight, bias)
    np.testing.assert_allclose(np.asarray(conv_out), np.asarray(ref), rtol=1e-5, atol=1e-5)
    np.testing.assert_allclose(np.asarray(x_out), np.asarray(x))

    print("KERNEL_OK")
</pallas_src>

<mosaic_0001>
module attributes {stable_mosaic.version = 11 : i64} {
  func.func @_pool_conv_kernel(%arg0: memref<2x192xf32, #tpu.memory_space<vmem>>, %arg1: memref<183x12xf32, #tpu.memory_space<vmem>>, %arg2: memref<1x12xf32, #tpu.memory_space<vmem>>, %arg3: memref<2x12xf32, #tpu.memory_space<vmem>>) attributes {dimension_semantics = [], scalar_prefetch = 0 : i64, scratch_operands = 0 : i64, tpu.core_type = #tpu.core_type<tc>} {
    %c0 = arith.constant 0 : index
    %c0_0 = arith.constant 0 : index
    %0 = vector.load %arg0[%c0, %c0_0] : memref<2x192xf32, #tpu.memory_space<vmem>>, vector<2x192xf32>
    %1 = vector.extract_strided_slice %0 {offsets = [0, 0], sizes = [2, 184], strides = [1, 1]} : vector<2x192xf32> to vector<2x184xf32>
    %2 = vector.extract_strided_slice %0 {offsets = [0, 8], sizes = [2, 184], strides = [1, 1]} : vector<2x192xf32> to vector<2x184xf32>
    %3 = arith.maximumf %1, %2 : vector<2x184xf32>
    %4 = vector.extract_strided_slice %3 {offsets = [0, 0], sizes = [2, 183], strides = [1, 1]} : vector<2x184xf32> to vector<2x183xf32>
    %5 = vector.extract_strided_slice %3 {offsets = [0, 1], sizes = [2, 183], strides = [1, 1]} : vector<2x184xf32> to vector<2x183xf32>
    %6 = arith.maximumf %4, %5 : vector<2x183xf32>
    %c0_1 = arith.constant 0 : index
    %c0_2 = arith.constant 0 : index
    %7 = vector.load %arg1[%c0_1, %c0_2] : memref<183x12xf32, #tpu.memory_space<vmem>>, vector<183x12xf32>
    %cst = arith.constant dense<0.000000e+00> : vector<2x12xf32>
    %8 = tpu.matmul %6, %7, %cst {dimension_numbers = #tpu.dot_dimension_numbers<[1], [0], [0], [1], [0, 0, 1, 1], [], []>} : vector<2x183xf32>, vector<183x12xf32>, vector<2x12xf32> -> vector<2x12xf32>
    %c0_3 = arith.constant 0 : index
    %c0_4 = arith.constant 0 : index
    %9 = vector.load %arg2[%c0_3, %c0_4] : memref<1x12xf32, #tpu.memory_space<vmem>>, vector<1x12xf32>
    %10 = vector.broadcast %9 : vector<1x12xf32> to vector<2x12xf32>
    %11 = arith.addf %8, %10 : vector<2x12xf32>
    %c0_5 = arith.constant 0 : index
    %c0_6 = arith.constant 0 : index
    %12 = vector.load %arg3[%c0_5, %c0_6] : memref<2x12xf32, #tpu.memory_space<vmem>>, vector<2x12xf32>
    tpu.vector_store %arg3[%c0_5, %c0_6], %11 {strides = array<i32>} : memref<2x12xf32, #tpu.memory_space<vmem>>, vector<2x12xf32>,
    return
  }
}

</mosaic_0001>

<llo_original>
// kernel: model_forward.1
$region0: #{model_forward.1}
  #allocation0 [shape = 'u32[]', space=smem, size = 0x4, offset = 0x4, fixed_abs, tag = 'smem constant byte address 0x4 - core index']
  #allocation1 [shape = 'u32[72,128]{1,0:T(1,128)}', space=vmem, size = 0x9000, scoped, tag = 'internal scratch']
  %s0 = inlined_call_operand.vmem [shape: f32[2,192], index: 0, kind: input, shape index: {}]
  %s1 = inlined_call_operand.vmem [shape: f32[183,12], index: 1, kind: input, shape index: {}]
  %s2 = inlined_call_operand.vmem [shape: f32[1,12], index: 2, kind: input, shape index: {}]
  %s3 = inlined_call_operand.vmem [shape: f32[2,12], index: 3, kind: output, shape index: {}]
  %s4 = sld [smem:[#allocation0]]
  $region22: #{model_forward.1} parent=0
    _
  %s6 = ssub.s32 1, %s4
  %s7 = scalar_select 0, %s6, %s4
  // Predicated region
  $region2: #{model_forward.1} parent=0 // pred_check
    _
  $region3: #{model_forward.1} parent=0 // pred_check_branch
    %9 = sbr.rel (0) target = $region5
  $region4: #{model_forward.1} parent=0 // pred_region
    _
  $region5: #{model_forward.1} parent=0 // pred_fallthru
    _
  // Predicated region
  $region6: #{model_forward.1} parent=0 // pred_check
    _
  $region7: #{model_forward.1} parent=0 // pred_check_branch
    %11 = sbr.rel (0) target = $region9
  $region8: #{model_forward.1} parent=0 // pred_region
    _
  $region9: #{model_forward.1} parent=0 // pred_fallthru
    _
  // Predicated region
  $region10: #{model_forward.1} parent=0 // pred_check
    _
  $region11: #{model_forward.1} parent=0 // pred_check_branch
    %13 = sbr.rel (0) target = $region13
  $region12: #{model_forward.1} parent=0 // pred_region
    _
  $region13: #{model_forward.1} parent=0 // pred_fallthru
    _
  %v14 = vld [vmem:[%s0] sm:$0xf]
  %16 = vrot.lane.b32.xlu0 %v14, 120
  %v17 = vpop.permute.xlu0 %16
  %v18 = vrot.slane %v17, 2
  %vm19 = vcmask 982016
  %v20 = vsel %vm19, %v17, %v18
  %v22 = vmax.f32 %v14, %v20
  %24 = vrot.lane.b32.xlu0 %v22, 127
  %v25 = vpop.permute.xlu0 %24
  %v26 = vrot.slane %v25, 2
  %vm27 = vcmask 1039360
  %v28 = vsel %vm27, %v25, %v26
  %v30 = vmax.f32 %v22, %v28
  %v31 = vld [vmem:[%s1] sm:$0xff]
  %v32 = vld [vmem:[%s1 + $0x8] sm:$0xff]
  %v33 = vld [vmem:[%s1 + $0x10] sm:$0xff]
  %v34 = vld [vmem:[%s1 + $0x18] sm:$0xff]
  %v35 = vld [vmem:[%s1 + $0x20] sm:$0xff]
  %v36 = vld [vmem:[%s1 + $0x28] sm:$0xff]
  %v37 = vld [vmem:[%s1 + $0x30] sm:$0xff]
  %v38 = vld [vmem:[%s1 + $0x38] sm:$0xff]
  %v39 = vld [vmem:[%s1 + $0x40] sm:$0xff]
  %v40 = vld [vmem:[%s1 + $0x48] sm:$0xff]
  %v41 = vld [vmem:[%s1 + $0x50] sm:$0xff]
  %v42 = vld [vmem:[%s1 + $0x58] sm:$0xff]
  %v43 = vld [vmem:[%s1 + $0x60] sm:$0xff]
  %v44 = vld [vmem:[%s1 + $0x68] sm:$0xff]
  %v45 = vld [vmem:[%s1 + $0x70] sm:$0xff]
  %v46 = vld [vmem:[%s1 + $0x78] sm:$0xff]
  %v47 = vld [vmem:[%s1 + $0x80] sm:$0xff]
  %v48 = vld [vmem:[%s1 + $0x88] sm:$0xff]
  %v49 = vld [vmem:[%s1 + $0x90] sm:$0xff]
  %v50 = vld [vmem:[%s1 + $0x98] sm:$0xff]
  %v51 = vld [vmem:[%s1 + $0xa0] sm:$0xff]
  %v52 = vld [vmem:[%s1 + $0xa8] sm:$0xff]
  %v53 = vld [vmem:[%s1 + $0xb0] sm:$0x7f]
  %v54 = vld [vmem:[%s2] sm:$0x1]
  %v56 = vperm.slane %v54, 0
  %59 = vst [vmem:[#allocation1] ss:$4 sm:$0xff] %v30
  %v60 = vld.sshfl [vmem:[#allocation1] sm:$0xff pattern:$0x73625140]
  %v61 = vld.sshfl [vmem:[#allocation1 + $0x8] sm:$0xff pattern:$0x73625140]
  %vm63 = vcmask 449536
  %v64 = vsel %vm63, %v61, 0
  %vm66 = vcmask 1046528
  %v68 = vsel %vm66, %v53, 0
  %70 = vmatpush.msra.mxu0 %v46
  %71 = vmatpush.msra.mxu0 %v45
  %72 = vmatpush.msra.mxu0 %v44
  %73 = vmatpush.msra.mxu0 %v43
  %74 = vmatpush.msra.mxu0 %v42
  %75 = vmatpush.msra.mxu0 %v41
  %76 = vmatpush.msra.mxu0 %v40
  %77 = vmatpush.msra.mxu0 %v39
  %78 = vmatpush.msra.mxu0 %v38
  %79 = vmatpush.msra.mxu0 %v37
  %80 = vmatpush.msra.mxu0 %v36
  %81 = vmatpush.msra.mxu0 %v35
  %82 = vmatpush.msra.mxu0 %v34
  %83 = vmatpush.msra.mxu0 %v33
  %84 = vmatpush.msra.mxu0 %v32
  %85 = vmatpush.msra.mxu0 %v31
  %86 = vmatmul.f32.gmra.mxu0 %v60
  %v87 = vpop.f32.mrf.mxu0
  %v88 = vadd.f32 %v56, %v87
  %89 = vdwg.mxu0
  %90 = vmatpush.msra.mxu0 0.0
  %91 = vmatpush.msra.mxu0 0.0
  %92 = vmatpush.msra.mxu0 0.0
  %93 = vmatpush.msra.mxu0 0.0
  %94 = vmatpush.msra.mxu0 0.0
  %95 = vmatpush.msra.mxu0 0.0
  %96 = vmatpush.msra.mxu0 0.0
  %97 = vmatpush.msra.mxu0 0.0
  %98 = vmatpush.msra.mxu0 0.0
  %99 = vmatpush.msra.mxu0 %v68
  %100 = vmatpush.msra.mxu0 %v52
  %101 = vmatpush.msra.mxu0 %v51
  %102 = vmatpush.msra.mxu0 %v50
  %103 = vmatpush.msra.mxu0 %v49
  %104 = vmatpush.msra.mxu0 %v48
  %105 = vmatpush.msra.mxu0 %v47
  %106 = vmatmul.f32.gmra.mxu0 %v64
  %v107 = vpop.f32.mrf.mxu0
  %v108 = vadd.f32 %v88, %v107
  %109 = vdwg.mxu0
  %vm110 = vcmask 91136
  %111 = vst.msk [vmem:[%s3] sm:$0x3] %vm110, %v108
  // Predicated region
  $region14: #{model_forward.1} parent=0 // pred_check
    _
  $region15: #{model_forward.1} parent=0 // pred_check_branch
    %113 = sbr.rel (0) target = $region17
  $region16: #{model_forward.1} parent=0 // pred_region
    _
  $region17: #{model_forward.1} parent=0 // pred_fallthru
    _
  // Predicated region
  $region18: #{model_forward.1} parent=0 // pred_check
    _
  $region19: #{model_forward.1} parent=0 // pred_check_branch
    %115 = sbr.rel (0) target = $region21
  $region20: #{model_forward.1} parent=0 // pred_region
    _
  $region21: #{model_forward.1} parent=0 // pred_fallthru
    _

</llo_original>
